<compile_context>
chip_gen: v6e
topology: v6e:2x2x1
jax: 0.10.0
libtpu: 0.0.40
codegen_flags: <defaults>
</compile_context>

<pallas_src>
import functools

import jax
import jax.numpy as jnp
from jax.experimental import pallas as pl
from jax.experimental.pallas import tpu as pltpu


def _cpchar_fused_kernel(x_ref, w1_ref, b1_ref, w2_ref, b2_ref, w3_ref, b3_ref,
                         o_ref, c1_ref, c2_ref, c3_ref, *, K):
    """Fused 3x (valid conv1d k=K + bias + ReLU), channels-last, batch folded into M."""
    B, L0, C0 = x_ref.shape
    C1 = w1_ref.shape[1]
    C2 = w2_ref.shape[1]
    L1 = L0 - (K - 1)
    L2 = L1 - (K - 1)
    L3 = L2 - (K - 1)

    x = x_ref[...]                                     # (B, L0, C0), already in VMEM

    # ---- layer 1: im2col -> (B*L1, K*C0), one MXU matmul --------------------
    for b in range(B):                                 # B, K are tiny static ints
        for k in range(K):
            c1_ref[b * L1:(b + 1) * L1, k * C0:(k + 1) * C0] = x[b, k:k + L1, :]
    h = jnp.dot(c1_ref[...], w1_ref[...], preferred_element_type=jnp.float32)
    h = jnp.maximum(h + b1_ref[...], 0.0)              # (B*L1, C1), VMEM-resident

    # ---- layer 2 -------------------------------------------------------------
    for b in range(B):
        for k in range(K):
            c2_ref[b * L2:(b + 1) * L2, k * C1:(k + 1) * C1] = (
                h[b * L1 + k:b * L1 + k + L2, :])
    h = jnp.dot(c2_ref[...], w2_ref[...], preferred_element_type=jnp.float32)
    h = jnp.maximum(h + b2_ref[...], 0.0)              # (B*L2, C2)

    # ---- layer 3 -------------------------------------------------------------
    for b in range(B):
        for k in range(K):
            c3_ref[b * L3:(b + 1) * L3, k * C2:(k + 1) * C2] = (
                h[b * L2 + k:b * L2 + k + L3, :])
    h = jnp.dot(c3_ref[...], w3_ref[...], preferred_element_type=jnp.float32)
    h = jnp.maximum(h + b3_ref[...], 0.0)              # (B*L3, 128), lane-dense

    for b in range(B):
        o_ref[b] = h[b * L3:(b + 1) * L3, :].astype(o_ref.dtype)


def cpchar_fused(x_nlc, kparams, *, K=3):
    """x_nlc: (B, L, C_in) f32; kparams: [(w_col (K*Cin, Cout), b (1, Cout)) x 3]."""
    B, L0, C0 = x_nlc.shape
    (w1, b1), (w2, b2), (w3, b3) = kparams
    C1, C2, C3 = w1.shape[1], w2.shape[1], w3.shape[1]
    L1 = L0 - (K - 1)
    L2 = L0 - 2 * (K - 1)
    L3 = L0 - 3 * (K - 1)

    def full(shape):
        # Whole-array block (all blocks equal full array dims -> no (8,128) issue).
        return pl.BlockSpec(shape, lambda i: (0,) * len(shape))

    kernel = functools.partial(_cpchar_fused_kernel, K=K)
    return pl.pallas_call(
        kernel,
        out_shape=jax.ShapeDtypeStruct((B, L3, C3), jnp.float32),
        grid=(1,),   # whole problem (<100 KiB) fits VMEM on v5e/v6e/v7x
        in_specs=[
            full((B, L0, C0)),
            full((K * C0, C1)), full((1, C1)),
            full((K * C1, C2)), full((1, C2)),
            full((K * C2, C3)), full((1, C3)),
        ],
        out_specs=full((B, L3, C3)),
        scratch_shapes=[
            pltpu.VMEM((B * L1, K * C0), jnp.float32),   # im2col layer 1
            pltpu.VMEM((B * L2, K * C1), jnp.float32),   # im2col layer 2
            pltpu.VMEM((B * L3, K * C2), jnp.float32),   # im2col layer 3
        ],
        compiler_params=pltpu.CompilerParams(
            dimension_semantics=("arbitrary",),
        ),
    )(x_nlc, w1, b1, w2, b2, w3, b3)


def init_params(key, input_channels, K=3):
    """Deterministic synthetic params in PyTorch layout: w (C_out, C_in, K), b (C_out,)."""
    layer_dims = [(input_channels, 32), (32, 64), (64, 128)]
    params = []
    for cin, cout in layer_dims:
        key, kw, kb = jax.random.split(key, 3)
        bound = 1.0 / (cin * K) ** 0.5
        w = jax.random.uniform(kw, (cout, cin, K), jnp.float32, -bound, bound)
        b = jax.random.uniform(kb, (cout,), jnp.float32, -bound, bound)
        params.append((w, b))
    return params


@jax.jit
def cpchar_forward(obs_input_ncl, params_pt):
    """obs_input_ncl: (B, C_in, L) PyTorch NCL -> (B, 128, L - 6)."""
    x = jnp.transpose(obs_input_ncl, (0, 2, 1))        # NCL -> NLC (channels on lanes)
    kparams = []
    for w_pt, b in params_pt:                          # (C_out, C_in, K) -> (K*C_in, C_out)
        cout, cin, k = w_pt.shape
        w_col = jnp.transpose(w_pt, (2, 1, 0)).reshape(k * cin, cout)
        kparams.append((w_col, b.reshape(1, cout)))
    y = cpchar_fused(x, kparams)                       # (B, L-6, 128), lane-dense
    return jnp.transpose(y, (0, 2, 1))                 # back to PyTorch NCL


def _reference_forward(obs_input_ncl, params_pt):
    x = obs_input_ncl
    for w_pt, b in params_pt:
        x = jax.lax.conv_general_dilated(
            x, w_pt, window_strides=(1,), padding="VALID",
            dimension_numbers=("NCH", "OIH", "NCH"),
            precision=jax.lax.Precision.HIGHEST)
        x = jnp.maximum(x + b[None, :, None], 0.0)     # Dropout == identity (eval)
    return x


if __name__ == "__main__":
    key = jax.random.PRNGKey(0)
    kx, kp = jax.random.split(key)

    B, C_IN, L = 2, 4, 32                              # small CPCHAR-style input
    obs_input = jax.random.normal(kx, (B, C_IN, L), jnp.float32)   # NCL like PyTorch
    params = init_params(kp, C_IN)

    out = cpchar_forward(obs_input, params)
    out = jax.block_until_ready(out)

    assert out.shape == (B, 128, L - 6), out.shape
    ref = _reference_forward(obs_input, params)
    assert jnp.allclose(out, ref, atol=1e-4, rtol=1e-4), "mismatch vs reference"

    print("KERNEL_OK")
</pallas_src>

<mosaic_0001>
module attributes {stable_mosaic.version = 11 : i64} {
  func.func @_cpchar_fused_kernel(%arg0: i32, %arg1: memref<2x32x4xf32, #tpu.memory_space<vmem>>, %arg2: memref<12x32xf32, #tpu.memory_space<vmem>>, %arg3: memref<1x32xf32, #tpu.memory_space<vmem>>, %arg4: memref<96x64xf32, #tpu.memory_space<vmem>>, %arg5: memref<1x64xf32, #tpu.memory_space<vmem>>, %arg6: memref<192x128xf32, #tpu.memory_space<vmem>>, %arg7: memref<1x128xf32, #tpu.memory_space<vmem>>, %arg8: memref<2x26x128xf32, #tpu.memory_space<vmem>>, %arg9: memref<60x12xf32, #tpu.memory_space<vmem>>, %arg10: memref<56x96xf32, #tpu.memory_space<vmem>>, %arg11: memref<52x192xf32, #tpu.memory_space<vmem>>) attributes {dimension_semantics = [#tpu.dimension_semantics<arbitrary>], iteration_bounds = array<i64: 1>, scalar_prefetch = 0 : i64, scratch_operands = 3 : i64, tpu.core_type = #tpu.core_type<tc>, window_params = [{pipeline_mode = #tpu.pipeline_mode<synchronous>, transform_indices = @transform_0, window_bounds = array<i64: 2, 32, 4>}, {pipeline_mode = #tpu.pipeline_mode<synchronous>, transform_indices = @transform_1, window_bounds = array<i64: 12, 32>}, {pipeline_mode = #tpu.pipeline_mode<synchronous>, transform_indices = @transform_2, window_bounds = array<i64: 1, 32>}, {pipeline_mode = #tpu.pipeline_mode<synchronous>, transform_indices = @transform_3, window_bounds = array<i64: 96, 64>}, {pipeline_mode = #tpu.pipeline_mode<synchronous>, transform_indices = @transform_4, window_bounds = array<i64: 1, 64>}, {pipeline_mode = #tpu.pipeline_mode<synchronous>, transform_indices = @transform_5, window_bounds = array<i64: 192, 128>}, {pipeline_mode = #tpu.pipeline_mode<synchronous>, transform_indices = @transform_6, window_bounds = array<i64: 1, 128>}, {pipeline_mode = #tpu.pipeline_mode<synchronous>, transform_indices = @transform_7, window_bounds = array<i64: 2, 26, 128>}]} {
    %c0 = arith.constant 0 : index
    %c0_0 = arith.constant 0 : index
    %c0_1 = arith.constant 0 : index
    %0 = vector.load %arg1[%c0, %c0_0, %c0_1] : memref<2x32x4xf32, #tpu.memory_space<vmem>>, vector<2x32x4xf32>
    %1 = vector.extract_strided_slice %0 {offsets = [0, 0, 0], sizes = [1, 30, 4], strides = [1, 1, 1]} : vector<2x32x4xf32> to vector<1x30x4xf32>
    %2 = vector.shape_cast %1 : vector<1x30x4xf32> to vector<30x4xf32>
    %c0_2 = arith.constant 0 : index
    %c0_3 = arith.constant 0 : index
    %3 = vector.load %arg9[%c0_2, %c0_3] : memref<60x12xf32, #tpu.memory_space<vmem>>, vector<30x4xf32>
    tpu.vector_store %arg9[%c0_2, %c0_3], %2 {strides = array<i32>} : memref<60x12xf32, #tpu.memory_space<vmem>>, vector<30x4xf32>,
    %4 = vector.extract_strided_slice %0 {offsets = [0, 1, 0], sizes = [1, 30, 4], strides = [1, 1, 1]} : vector<2x32x4xf32> to vector<1x30x4xf32>
    %5 = vector.shape_cast %4 : vector<1x30x4xf32> to vector<30x4xf32>
    %c0_4 = arith.constant 0 : index
    %c4 = arith.constant 4 : index
    %6 = vector.load %arg9[%c0_4, %c4] : memref<60x12xf32, #tpu.memory_space<vmem>>, vector<30x4xf32>
    tpu.vector_store %arg9[%c0_4, %c4], %5 {strides = array<i32>} : memref<60x12xf32, #tpu.memory_space<vmem>>, vector<30x4xf32>,
    %7 = vector.extract_strided_slice %0 {offsets = [0, 2, 0], sizes = [1, 30, 4], strides = [1, 1, 1]} : vector<2x32x4xf32> to vector<1x30x4xf32>
    %8 = vector.shape_cast %7 : vector<1x30x4xf32> to vector<30x4xf32>
    %c0_5 = arith.constant 0 : index
    %c8 = arith.constant 8 : index
    %9 = vector.load %arg9[%c0_5, %c8] : memref<60x12xf32, #tpu.memory_space<vmem>>, vector<30x4xf32>
    tpu.vector_store %arg9[%c0_5, %c8], %8 {strides = array<i32>} : memref<60x12xf32, #tpu.memory_space<vmem>>, vector<30x4xf32>,
    %10 = vector.extract_strided_slice %0 {offsets = [1, 0, 0], sizes = [1, 30, 4], strides = [1, 1, 1]} : vector<2x32x4xf32> to vector<1x30x4xf32>
    %11 = vector.shape_cast %10 : vector<1x30x4xf32> to vector<30x4xf32>
    %c30 = arith.constant 30 : index
    %c0_6 = arith.constant 0 : index
    %12 = vector.load %arg9[%c30, %c0_6] : memref<60x12xf32, #tpu.memory_space<vmem>>, vector<30x4xf32>
    tpu.vector_store %arg9[%c30, %c0_6], %11 {strides = array<i32>} : memref<60x12xf32, #tpu.memory_space<vmem>>, vector<30x4xf32>,
    %13 = vector.extract_strided_slice %0 {offsets = [1, 1, 0], sizes = [1, 30, 4], strides = [1, 1, 1]} : vector<2x32x4xf32> to vector<1x30x4xf32>
    %14 = vector.shape_cast %13 : vector<1x30x4xf32> to vector<30x4xf32>
    %c30_7 = arith.constant 30 : index
    %c4_8 = arith.constant 4 : index
    %15 = vector.load %arg9[%c30_7, %c4_8] : memref<60x12xf32, #tpu.memory_space<vmem>>, vector<30x4xf32>
    tpu.vector_store %arg9[%c30_7, %c4_8], %14 {strides = array<i32>} : memref<60x12xf32, #tpu.memory_space<vmem>>, vector<30x4xf32>,
    %16 = vector.extract_strided_slice %0 {offsets = [1, 2, 0], sizes = [1, 30, 4], strides = [1, 1, 1]} : vector<2x32x4xf32> to vector<1x30x4xf32>
    %17 = vector.shape_cast %16 : vector<1x30x4xf32> to vector<30x4xf32>
    %c30_9 = arith.constant 30 : index
    %c8_10 = arith.constant 8 : index
    %18 = vector.load %arg9[%c30_9, %c8_10] : memref<60x12xf32, #tpu.memory_space<vmem>>, vector<30x4xf32>
    tpu.vector_store %arg9[%c30_9, %c8_10], %17 {strides = array<i32>} : memref<60x12xf32, #tpu.memory_space<vmem>>, vector<30x4xf32>,
    %c0_11 = arith.constant 0 : index
    %c0_12 = arith.constant 0 : index
    %19 = vector.load %arg9[%c0_11, %c0_12] : memref<60x12xf32, #tpu.memory_space<vmem>>, vector<60x12xf32>
    %c0_13 = arith.constant 0 : index
    %c0_14 = arith.constant 0 : index
    %20 = vector.load %arg2[%c0_13, %c0_14] : memref<12x32xf32, #tpu.memory_space<vmem>>, vector<12x32xf32>
    %cst = arith.constant dense<0.000000e+00> : vector<60x32xf32>
    %21 = tpu.matmul %19, %20, %cst {dimension_numbers = #tpu.dot_dimension_numbers<[1], [0], [0], [1], [0, 0, 1, 1], [], []>} : vector<60x12xf32>, vector<12x32xf32>, vector<60x32xf32> -> vector<60x32xf32>
    %c0_15 = arith.constant 0 : index
    %c0_16 = arith.constant 0 : index
    %22 = vector.load %arg3[%c0_15, %c0_16] : memref<1x32xf32, #tpu.memory_space<vmem>>, vector<1x32xf32>
    %23 = vector.broadcast %22 : vector<1x32xf32> to vector<60x32xf32>
    %24 = arith.addf %21, %23 : vector<60x32xf32>
    %cst_17 = arith.constant 0.000000e+00 : f32
    %25 = vector.broadcast %cst_17 : f32 to vector<60x32xf32>
    %26 = arith.maximumf %24, %25 : vector<60x32xf32>
    %27 = vector.extract_strided_slice %26 {offsets = [0, 0], sizes = [28, 32], strides = [1, 1]} : vector<60x32xf32> to vector<28x32xf32>
    %c0_18 = arith.constant 0 : index
    %c0_19 = arith.constant 0 : index
    %28 = vector.load %arg10[%c0_18, %c0_19] : memref<56x96xf32, #tpu.memory_space<vmem>>, vector<28x32xf32>
    tpu.vector_store %arg10[%c0_18, %c0_19], %27 {strides = array<i32>} : memref<56x96xf32, #tpu.memory_space<vmem>>, vector<28x32xf32>,
    %29 = vector.extract_strided_slice %26 {offsets = [1, 0], sizes = [28, 32], strides = [1, 1]} : vector<60x32xf32> to vector<28x32xf32>
    %c0_20 = arith.constant 0 : index
    %c32 = arith.constant 32 : index
    %30 = vector.load %arg10[%c0_20, %c32] : memref<56x96xf32, #tpu.memory_space<vmem>>, vector<28x32xf32>
    tpu.vector_store %arg10[%c0_20, %c32], %29 {strides = array<i32>} : memref<56x96xf32, #tpu.memory_space<vmem>>, vector<28x32xf32>,
    %31 = vector.extract_strided_slice %26 {offsets = [2, 0], sizes = [28, 32], strides = [1, 1]} : vector<60x32xf32> to vector<28x32xf32>
    %c0_21 = arith.constant 0 : index
    %c64 = arith.constant 64 : index
    %32 = vector.load %arg10[%c0_21, %c64] : memref<56x96xf32, #tpu.memory_space<vmem>>, vector<28x32xf32>
    tpu.vector_store %arg10[%c0_21, %c64], %31 {strides = array<i32>} : memref<56x96xf32, #tpu.memory_space<vmem>>, vector<28x32xf32>,
    %33 = vector.extract_strided_slice %26 {offsets = [30, 0], sizes = [28, 32], strides = [1, 1]} : vector<60x32xf32> to vector<28x32xf32>
    %c28 = arith.constant 28 : index
    %c0_22 = arith.constant 0 : index
    %34 = vector.load %arg10[%c28, %c0_22] : memref<56x96xf32, #tpu.memory_space<vmem>>, vector<28x32xf32>
    tpu.vector_store %arg10[%c28, %c0_22], %33 {strides = array<i32>} : memref<56x96xf32, #tpu.memory_space<vmem>>, vector<28x32xf32>,
    %35 = vector.extract_strided_slice %26 {offsets = [31, 0], sizes = [28, 32], strides = [1, 1]} : vector<60x32xf32> to vector<28x32xf32>
    %c28_23 = arith.constant 28 : index
    %c32_24 = arith.constant 32 : index
    %36 = vector.load %arg10[%c28_23, %c32_24] : memref<56x96xf32, #tpu.memory_space<vmem>>, vector<28x32xf32>
    tpu.vector_store %arg10[%c28_23, %c32_24], %35 {strides = array<i32>} : memref<56x96xf32, #tpu.memory_space<vmem>>, vector<28x32xf32>,
    %37 = vector.extract_strided_slice %26 {offsets = [32, 0], sizes = [28, 32], strides = [1, 1]} : vector<60x32xf32> to vector<28x32xf32>
    %c28_25 = arith.constant 28 : index
    %c64_26 = arith.constant 64 : index
    %38 = vector.load %arg10[%c28_25, %c64_26] : memref<56x96xf32, #tpu.memory_space<vmem>>, vector<28x32xf32>
    tpu.vector_store %arg10[%c28_25, %c64_26], %37 {strides = array<i32>} : memref<56x96xf32, #tpu.memory_space<vmem>>, vector<28x32xf32>,
    %c0_27 = arith.constant 0 : index
    %c0_28 = arith.constant 0 : index
    %39 = vector.load %arg10[%c0_27, %c0_28] : memref<56x96xf32, #tpu.memory_space<vmem>>, vector<56x96xf32>
    %c0_29 = arith.constant 0 : index
    %c0_30 = arith.constant 0 : index
    %40 = vector.load %arg4[%c0_29, %c0_30] : memref<96x64xf32, #tpu.memory_space<vmem>>, vector<96x64xf32>
    %cst_31 = arith.constant dense<0.000000e+00> : vector<56x64xf32>
    %41 = tpu.matmul %39, %40, %cst_31 {dimension_numbers = #tpu.dot_dimension_numbers<[1], [0], [0], [1], [0, 0, 1, 1], [], []>} : vector<56x96xf32>, vector<96x64xf32>, vector<56x64xf32> -> vector<56x64xf32>
    %c0_32 = arith.constant 0 : index
    %c0_33 = arith.constant 0 : index
    %42 = vector.load %arg5[%c0_32, %c0_33] : memref<1x64xf32, #tpu.memory_space<vmem>>, vector<1x64xf32>
    %43 = vector.broadcast %42 : vector<1x64xf32> to vector<56x64xf32>
    %44 = arith.addf %41, %43 : vector<56x64xf32>
    %cst_34 = arith.constant 0.000000e+00 : f32
    %45 = vector.broadcast %cst_34 : f32 to vector<56x64xf32>
    %46 = arith.maximumf %44, %45 : vector<56x64xf32>
    %47 = vector.extract_strided_slice %46 {offsets = [0, 0], sizes = [26, 64], strides = [1, 1]} : vector<56x64xf32> to vector<26x64xf32>
    %c0_35 = arith.constant 0 : index
    %c0_36 = arith.constant 0 : index
    %48 = vector.load %arg11[%c0_35, %c0_36] : memref<52x192xf32, #tpu.memory_space<vmem>>, vector<26x64xf32>
    tpu.vector_store %arg11[%c0_35, %c0_36], %47 {strides = array<i32>} : memref<52x192xf32, #tpu.memory_space<vmem>>, vector<26x64xf32>,
    %49 = vector.extract_strided_slice %46 {offsets = [1, 0], sizes = [26, 64], strides = [1, 1]} : vector<56x64xf32> to vector<26x64xf32>
    %c0_37 = arith.constant 0 : index
    %c64_38 = arith.constant 64 : index
    %50 = vector.load %arg11[%c0_37, %c64_38] : memref<52x192xf32, #tpu.memory_space<vmem>>, vector<26x64xf32>
    tpu.vector_store %arg11[%c0_37, %c64_38], %49 {strides = array<i32>} : memref<52x192xf32, #tpu.memory_space<vmem>>, vector<26x64xf32>,
    %51 = vector.extract_strided_slice %46 {offsets = [2, 0], sizes = [26, 64], strides = [1, 1]} : vector<56x64xf32> to vector<26x64xf32>
    %c0_39 = arith.constant 0 : index
    %c128 = arith.constant 128 : index
    %52 = vector.load %arg11[%c0_39, %c128] : memref<52x192xf32, #tpu.memory_space<vmem>>, vector<26x64xf32>
    tpu.vector_store %arg11[%c0_39, %c128], %51 {strides = array<i32>} : memref<52x192xf32, #tpu.memory_space<vmem>>, vector<26x64xf32>,
    %53 = vector.extract_strided_slice %46 {offsets = [28, 0], sizes = [26, 64], strides = [1, 1]} : vector<56x64xf32> to vector<26x64xf32>
    %c26 = arith.constant 26 : index
    %c0_40 = arith.constant 0 : index
    %54 = vector.load %arg11[%c26, %c0_40] : memref<52x192xf32, #tpu.memory_space<vmem>>, vector<26x64xf32>
    tpu.vector_store %arg11[%c26, %c0_40], %53 {strides = array<i32>} : memref<52x192xf32, #tpu.memory_space<vmem>>, vector<26x64xf32>,
    %55 = vector.extract_strided_slice %46 {offsets = [29, 0], sizes = [26, 64], strides = [1, 1]} : vector<56x64xf32> to vector<26x64xf32>
    %c26_41 = arith.constant 26 : index
    %c64_42 = arith.constant 64 : index
    %56 = vector.load %arg11[%c26_41, %c64_42] : memref<52x192xf32, #tpu.memory_space<vmem>>, vector<26x64xf32>
    tpu.vector_store %arg11[%c26_41, %c64_42], %55 {strides = array<i32>} : memref<52x192xf32, #tpu.memory_space<vmem>>, vector<26x64xf32>,
    %57 = vector.extract_strided_slice %46 {offsets = [30, 0], sizes = [26, 64], strides = [1, 1]} : vector<56x64xf32> to vector<26x64xf32>
    %c26_43 = arith.constant 26 : index
    %c128_44 = arith.constant 128 : index
    %58 = vector.load %arg11[%c26_43, %c128_44] : memref<52x192xf32, #tpu.memory_space<vmem>>, vector<26x64xf32>
    tpu.vector_store %arg11[%c26_43, %c128_44], %57 {strides = array<i32>} : memref<52x192xf32, #tpu.memory_space<vmem>>, vector<26x64xf32>,
    %c0_45 = arith.constant 0 : index
    %c0_46 = arith.constant 0 : index
    %59 = vector.load %arg11[%c0_45, %c0_46] : memref<52x192xf32, #tpu.memory_space<vmem>>, vector<52x192xf32>
    %c0_47 = arith.constant 0 : index
    %c0_48 = arith.constant 0 : index
    %60 = vector.load %arg6[%c0_47, %c0_48] : memref<192x128xf32, #tpu.memory_space<vmem>>, vector<192x128xf32>
    %cst_49 = arith.constant dense<0.000000e+00> : vector<52x128xf32>
    %61 = tpu.matmul %59, %60, %cst_49 {dimension_numbers = #tpu.dot_dimension_numbers<[1], [0], [0], [1], [0, 0, 1, 1], [], []>} : vector<52x192xf32>, vector<192x128xf32>, vector<52x128xf32> -> vector<52x128xf32>
    %c0_50 = arith.constant 0 : index
    %c0_51 = arith.constant 0 : index
    %62 = vector.load %arg7[%c0_50, %c0_51] : memref<1x128xf32, #tpu.memory_space<vmem>>, vector<1x128xf32>
    %63 = vector.broadcast %62 : vector<1x128xf32> to vector<52x128xf32>
    %64 = arith.addf %61, %63 : vector<52x128xf32>
    %cst_52 = arith.constant 0.000000e+00 : f32
    %65 = vector.broadcast %cst_52 : f32 to vector<52x128xf32>
    %66 = arith.maximumf %64, %65 : vector<52x128xf32>
    %67 = vector.extract_strided_slice %66 {offsets = [0, 0], sizes = [26, 128], strides = [1, 1]} : vector<52x128xf32> to vector<26x128xf32>
    %c0_53 = arith.constant 0 : index
    %c0_54 = arith.constant 0 : index
    %c0_55 = arith.constant 0 : index
    %68 = vector.load %arg8[%c0_53, %c0_54, %c0_55] : memref<2x26x128xf32, #tpu.memory_space<vmem>>, vector<1x26x128xf32>
    %69 = vector.shape_cast %68 : vector<1x26x128xf32> to vector<26x128xf32>
    %70 = vector.shape_cast %67 : vector<26x128xf32> to vector<1x26x128xf32>
    tpu.vector_store %arg8[%c0_53, %c0_54, %c0_55], %70 {strides = array<i32>} : memref<2x26x128xf32, #tpu.memory_space<vmem>>, vector<1x26x128xf32>,
    %71 = vector.extract_strided_slice %66 {offsets = [26, 0], sizes = [26, 128], strides = [1, 1]} : vector<52x128xf32> to vector<26x128xf32>
    %c1 = arith.constant 1 : index
    %c0_56 = arith.constant 0 : index
    %c0_57 = arith.constant 0 : index
    %72 = vector.load %arg8[%c1, %c0_56, %c0_57] : memref<2x26x128xf32, #tpu.memory_space<vmem>>, vector<1x26x128xf32>
    %73 = vector.shape_cast %72 : vector<1x26x128xf32> to vector<26x128xf32>
    %74 = vector.shape_cast %71 : vector<26x128xf32> to vector<1x26x128xf32>
    tpu.vector_store %arg8[%c1, %c0_56, %c0_57], %74 {strides = array<i32>} : memref<2x26x128xf32, #tpu.memory_space<vmem>>, vector<1x26x128xf32>,
    return
  }
  func.func @transform_0(%arg0: i32) -> (i32, i32, i32) {
    %c0_i32 = arith.constant 0 : i32
    %c0_i32_0 = arith.constant 0 : i32
    %c0_i32_1 = arith.constant 0 : i32
    %c0_i32_2 = arith.constant 0 : i32
    return %c0_i32, %c0_i32_0, %c0_i32_1 : i32, i32, i32
  }
  func.func @transform_1(%arg0: i32) -> (i32, i32) {
    %c0_i32 = arith.constant 0 : i32
    %c0_i32_0 = arith.constant 0 : i32
    %c0_i32_1 = arith.constant 0 : i32
    return %c0_i32, %c0_i32_0 : i32, i32
  }
  func.func @transform_2(%arg0: i32) -> (i32, i32) {
    %c0_i32 = arith.constant 0 : i32
    %c0_i32_0 = arith.constant 0 : i32
    %c0_i32_1 = arith.constant 0 : i32
    return %c0_i32, %c0_i32_0 : i32, i32
  }
  func.func @transform_3(%arg0: i32) -> (i32, i32) {
    %c0_i32 = arith.constant 0 : i32
    %c0_i32_0 = arith.constant 0 : i32
    %c0_i32_1 = arith.constant 0 : i32
    return %c0_i32, %c0_i32_0 : i32, i32
  }
  func.func @transform_4(%arg0: i32) -> (i32, i32) {
    %c0_i32 = arith.constant 0 : i32
    %c0_i32_0 = arith.constant 0 : i32
    %c0_i32_1 = arith.constant 0 : i32
    return %c0_i32, %c0_i32_0 : i32, i32
  }
  func.func @transform_5(%arg0: i32) -> (i32, i32) {
    %c0_i32 = arith.constant 0 : i32
    %c0_i32_0 = arith.constant 0 : i32
    %c0_i32_1 = arith.constant 0 : i32
    return %c0_i32, %c0_i32_0 : i32, i32
  }
  func.func @transform_6(%arg0: i32) -> (i32, i32) {
    %c0_i32 = arith.constant 0 : i32
    %c0_i32_0 = arith.constant 0 : i32
    %c0_i32_1 = arith.constant 0 : i32
    return %c0_i32, %c0_i32_0 : i32, i32
  }
  func.func @transform_7(%arg0: i32) -> (i32, i32, i32) {
    %c0_i32 = arith.constant 0 : i32
    %c0_i32_0 = arith.constant 0 : i32
    %c0_i32_1 = arith.constant 0 : i32
    %c0_i32_2 = arith.constant 0 : i32
    return %c0_i32, %c0_i32_0, %c0_i32_1 : i32, i32, i32
  }
}

</mosaic_0001>

<llo_original>
// kernel: cpchar_forward.1
$region0: #{cpchar_forward.1}
  #allocation0 [shape = 'u32[]', space=smem, size = 0x4, offset = 0x4, fixed_abs, tag = 'smem constant byte address 0x4 - core index']
  #allocation1 [shape = 'u32[144,128]{1,0:T(1,128)}', space=vmem, size = 0x12000, scoped, tag = 'internal scratch']
  #allocation2 [shape = 'f32[60,12]{1,0:T(8,128)}', space=vmem, size = 0x8000, scoped, tag = 'scratch operand']
  #allocation3 [shape = 'f32[56,96]{1,0:T(8,128)}', space=vmem, size = 0x7000, scoped, tag = 'scratch operand']
  #allocation4 [shape = 'f32[52,192]{1,0:T(8,128)}', space=vmem, size = 0xe000, scoped, tag = 'scratch operand']
  %s0 = inlined_call_operand.vmem [shape: f32[2,32,4], index: 0, kind: input, shape index: {}]
  %s1 = inlined_call_operand.vmem [shape: f32[12,32], index: 1, kind: input, shape index: {}]
  %s2 = inlined_call_operand.vmem [shape: f32[1,32], index: 2, kind: input, shape index: {}]
  %s3 = inlined_call_operand.vmem [shape: f32[96,64], index: 3, kind: input, shape index: {}]
  %s4 = inlined_call_operand.vmem [shape: f32[1,64], index: 4, kind: input, shape index: {}]
  %s5 = inlined_call_operand.hbm [shape: f32[192,128], index: 5, kind: input, shape index: {}]
  %s6 = inlined_call_operand.vmem [shape: f32[1,128], index: 6, kind: input, shape index: {}]
  %s7 = inlined_call_operand.vmem [shape: f32[2,26,128], index: 7, kind: output, shape index: {}]
  %s8 = sld [smem:[#allocation0]]
  $region42: #{cpchar_forward.1} parent=0
    _
  %s10 = ssub.s32 1, %s8
  %s11 = scalar_select 0, %s10, %s8
  $region1: #{cpchar_forward.1} parent=0
    #allocation5 [shape = 'u8[98304]{0}', space=vmem, size = 0x18000, scoped, tag = 'input window, operand 5, single buffered']
    #allocation6 [shape = 's32[1]{0}', space=sflag, size = 0x4, scoped, tag = 'scoped memory for cpchar_forward.1']
    %12 = vsyncpa [#allocation6], 0
    // Predicated region
    $region2: #{cpchar_forward.1} parent=1 // pred_check
      _
    $region3: #{cpchar_forward.1} parent=1 // pred_check_branch
      %14 = sbr.rel (0) target = $region5
    $region4: #{cpchar_forward.1} parent=1 // pred_region
      _
    $region5: #{cpchar_forward.1} parent=1 // pred_fallthru
      _
    // Predicated region
    $region6: #{cpchar_forward.1} parent=1 // pred_check
      _
    $region7: #{cpchar_forward.1} parent=1 // pred_check_branch
      %16 = sbr.rel (0) target = $region9
    $region8: #{cpchar_forward.1} parent=1 // pred_region
      _
    $region9: #{cpchar_forward.1} parent=1 // pred_fallthru
      _
    // Predicated region
    $region10: #{cpchar_forward.1} parent=1 // pred_check
      _
    $region11: #{cpchar_forward.1} parent=1 // pred_check_branch
      %18 = sbr.rel (0) target = $region13
    $region12: #{cpchar_forward.1} parent=1 // pred_region
      _
    $region13: #{cpchar_forward.1} parent=1 // pred_fallthru
      _
    // Predicated region
    $region14: #{cpchar_forward.1} parent=1 // pred_check
      _
    $region15: #{cpchar_forward.1} parent=1 // pred_check_branch
      %20 = sbr.rel (0) target = $region17
    $region16: #{cpchar_forward.1} parent=1 // pred_region
      _
    $region17: #{cpchar_forward.1} parent=1 // pred_fallthru
      _
    // Predicated region
    $region18: #{cpchar_forward.1} parent=1 // pred_check
      _
    $region19: #{cpchar_forward.1} parent=1 // pred_check_branch
      %22 = sbr.rel (0) target = $region21
    $region20: #{cpchar_forward.1} parent=1 // pred_region
      _
    $region21: #{cpchar_forward.1} parent=1 // pred_fallthru
      _
    // Predicated region
    $region22: #{cpchar_forward.1} parent=1 // pred_check
      _
    $region23: #{cpchar_forward.1} parent=1 // pred_check_branch
      %24 = sbr.rel (0) target = $region25
    $region24: #{cpchar_forward.1} parent=1 // pred_region
      %s26 = ssub.s32 3072, 3072
      %27 = vsyncadd [#allocation6], %s26
      %s28 = sshll.u32 [#allocation5], 4
      %s29 = int_to_ptr.vmem [resolvable:$true] %s28
      %34 = dma.hbm_to_vmem [thread:$0]  %s5, 3072, %s29, [#allocation6], 128, 128, 8
    $region25: #{cpchar_forward.1} parent=1 // pred_fallthru
      _
    // Predicated region
    $region26: #{cpchar_forward.1} parent=1 // pred_check
      _
    $region27: #{cpchar_forward.1} parent=1 // pred_check_branch
      %36 = sbr.rel (0) target = $region29
    $region28: #{cpchar_forward.1} parent=1 // pred_region
      _
    $region29: #{cpchar_forward.1} parent=1 // pred_fallthru
      _
    // Predicated region
    $region30: #{cpchar_forward.1} parent=1 // pred_check
      _
    $region31: #{cpchar_forward.1} parent=1 // pred_check_branch
      %38 = sbr.rel (0) target = $region33
    $region32: #{cpchar_forward.1} parent=1 // pred_region
      %39 = dma.done [#allocation6], 3072
    $region33: #{cpchar_forward.1} parent=1 // pred_fallthru
      _
    %v40 = vld [vmem:[%s0] sm:$0xff]
    %v41 = vld [vmem:[%s0 + $0x8] sm:$0xff]
    %v42 = vld [vmem:[%s0 + $0x10] sm:$0xff]
    %v43 = vld [vmem:[%s0 + $0x18] sm:$0xff]
    %v44 = vld [vmem:[%s0 + $0x20] sm:$0xff]
    %v45 = vld [vmem:[%s0 + $0x28] sm:$0xff]
    %v46 = vld [vmem:[%s0 + $0x30] sm:$0xff]
    %v47 = vld [vmem:[%s0 + $0x38] sm:$0xff]
    %vm48 = vcmask 31744
    %49 = vst.msk [vmem:[#allocation2] sm:$0xff] %vm48, %v40
    %50 = vst.msk [vmem:[#allocation2 + $0x8] sm:$0xff] %vm48, %v41
    %51 = vst.msk [vmem:[#allocation2 + $0x10] sm:$0xff] %vm48, %v42
    %vm52 = vcmask 29696
    %53 = vst.msk [vmem:[#allocation2 + $0x18] sm:$0x3f] %vm52, %v43
    %58 = vrot.lane.b32.xlu0 %v40, 4
    %v59 = vpop.permute.xlu0 %58
    %60 = vrot.lane.b32.xlu0 %v41, 4
    %v61 = vpop.permute.xlu0 %60
    %62 = vrot.lane.b32.xlu0 %v42, 4
    %v63 = vpop.permute.xlu0 %62
    %64 = vrot.lane.b32.xlu0 %v43, 4
    %v65 = vpop.permute.xlu0 %64
    %vm70 = vcmask 64545
    %71 = vst.msk [vmem:[#allocation2 - $0x1] sm:$0xfe] %vm70, %v59
    %vm72 = vcmask 64544
    %73 = vst.msk [vmem:[#allocation2 + $0x7] sm:$0xff] %vm72, %v61
    %74 = vst.msk [vmem:[#allocation2 + $0xf] sm:$0xff] %vm72, %v63
    %vm75 = vcmask 63520
    %76 = vst.msk [vmem:[#allocation2 + $0x17] sm:$0x7f] %vm75, %v65
    %77 = vrot.lane.b32.xlu0 %v40, 8
    %v78 = vpop.permute.xlu0 %77
    %79 = vrot.lane.b32.xlu0 %v41, 8
    %v80 = vpop.permute.xlu0 %79
    %81 = vrot.lane.b32.xlu0 %v42, 8
    %v82 = vpop.permute.xlu0 %81
    %83 = vrot.lane.b32.xlu0 %v43, 8
    %v84 = vpop.permute.xlu0 %83
    %vm89 = vcmask 97346
    %90 = vst.msk [vmem:[#allocation2 - $0x2] sm:$0xfc] %vm89, %v78
    %vm91 = vcmask 97344
    %92 = vst.msk [vmem:[#allocation2 + $0x6] sm:$0xff] %vm91, %v80
    %93 = vst.msk [vmem:[#allocation2 + $0xe] sm:$0xff] %vm91, %v82
    %94 = vst.msk [vmem:[#allocation2 + $0x16] sm:$0xff] %vm91, %v84
    %95 = vst.msk [vmem:[#allocation2 + $0x1e] sm:$0xff] %vm48, %v44
    %96 = vst.msk [vmem:[#allocation2 + $0x26] sm:$0xff] %vm48, %v45
    %97 = vst.msk [vmem:[#allocation2 + $0x2e] sm:$0xff] %vm48, %v46
    %98 = vst.msk [vmem:[#allocation2 + $0x36] sm:$0x3f] %vm52, %v47
    %103 = vrot.lane.b32.xlu0 %v44, 4
    %v104 = vpop.permute.xlu0 %103
    %105 = vrot.lane.b32.xlu0 %v45, 4
    %v106 = vpop.permute.xlu0 %105
    %107 = vrot.lane.b32.xlu0 %v46, 4
    %v108 = vpop.permute.xlu0 %107
    %109 = vrot.lane.b32.xlu0 %v47, 4
    %v110 = vpop.permute.xlu0 %109
    %115 = vst.msk [vmem:[#allocation2 + $0x1d] sm:$0xfe] %vm70, %v104
    %116 = vst.msk [vmem:[#allocation2 + $0x25] sm:$0xff] %vm72, %v106
    %117 = vst.msk [vmem:[#allocation2 + $0x2d] sm:$0xff] %vm72, %v108
    %118 = vst.msk [vmem:[#allocation2 + $0x35] sm:$0x7f] %vm75, %v110
    %119 = vrot.lane.b32.xlu0 %v44, 8
    %v120 = vpop.permute.xlu0 %119
    %121 = vrot.lane.b32.xlu0 %v45, 8
    %v122 = vpop.permute.xlu0 %121
    %123 = vrot.lane.b32.xlu0 %v46, 8
    %v124 = vpop.permute.xlu0 %123
    %125 = vrot.lane.b32.xlu0 %v47, 8
    %v126 = vpop.permute.xlu0 %125
    %131 = vst.msk [vmem:[#allocation2 + $0x1c] sm:$0xfc] %vm89, %v120
    %132 = vst.msk [vmem:[#allocation2 + $0x24] sm:$0xff] %vm91, %v122
    %133 = vst.msk [vmem:[#allocation2 + $0x2c] sm:$0xff] %vm91, %v124
    %134 = vst.msk [vmem:[#allocation2 + $0x34] sm:$0xff] %vm91, %v126
    %v135 = vld [vmem:[#allocation2] sm:$0xff]
    %v136 = vld [vmem:[#allocation2 + $0x8] sm:$0xff]
    %v137 = vld [vmem:[#allocation2 + $0x10] sm:$0xff]
    %v138 = vld [vmem:[#allocation2 + $0x18] sm:$0xff]
    %v139 = vld [vmem:[#allocation2 + $0x20] sm:$0xff]
    %v140 = vld [vmem:[#allocation2 + $0x28] sm:$0xff]
    %v141 = vld [vmem:[#allocation2 + $0x30] sm:$0xff]
    %v142 = vld [vmem:[#allocation2 + $0x38] sm:$0xf]
    %v143 = vld [vmem:[%s1] sm:$0xff]
    %v144 = vld [vmem:[%s1 + $0x8] sm:$0xf]
    %v145 = vld [vmem:[%s2] sm:$0x1]
    %v147 = vlaneseq
    %v148 = vshrl.u32 %v147, 7
    %v149 = vsub.s32 0, %v148
    %v150 = vrot.slane %v145, %v149
    %vm152 = vcmask 97280
    %v154 = vsel %vm152, %v135, 0
    %v157 = vsel %vm152, %v136, 0
    %v160 = vsel %vm152, %v137, 0
    %v163 = vsel %vm152, %v138, 0
    %v166 = vsel %vm152, %v139, 0
    %v169 = vsel %vm152, %v140, 0
    %v172 = vsel %vm152, %v141, 0
    %v175 = vsel %vm152, %v142, 0
    %vm177 = vcmask 1043456
    %v179 = vsel %vm177, %v144, 0
    %181 = vmatprep.subr.mxu0 0.0
    %182 = vmatpush1.msra.mxu0 0.0
    %183 = vmatprep.subr.mxu0 0.0
    %184 = vmatpush1.msra.mxu0 0.0
    %185 = vmatprep.subr.mxu0 0.0
    %186 = vmatpush1.msra.mxu0 0.0
    %187 = vmatprep.subr.mxu0 0.0
    %188 = vmatpush1.msra.mxu0 0.0
    %189 = vmatprep.subr.mxu0 0.0
    %190 = vmatpush1.msra.mxu0 0.0
    %191 = vmatprep.subr.mxu0 0.0
    %192 = vmatpush1.msra.mxu0 0.0
    %193 = vmatprep.subr.mxu0 0.0
    %194 = vmatpush1.msra.mxu0 0.0
    %195 = vmatprep.subr.mxu0 0.0
    %196 = vmatpush1.msra.mxu0 0.0
    %197 = vmatprep.subr.mxu0 0.0
    %198 = vmatpush1.msra.mxu0 0.0
    %199 = vmatprep.subr.mxu0 0.0
    %200 = vmatpush1.msra.mxu0 0.0
    %201 = vmatprep.subr.mxu0 0.0
    %202 = vmatpush1.msra.mxu0 0.0
    %203 = vmatprep.subr.mxu0 0.0
    %204 = vmatpush1.msra.mxu0 0.0
    %205 = vmatprep.subr.mxu0 0.0
    %206 = vmatpush1.msra.mxu0 0.0
    %207 = vmatprep.subr.mxu0 0.0
    %208 = vmatpush1.msra.mxu0 0.0
    %209 = vmatprep.subr.mxu0 0.0
    %210 = vmatpush1.msra.mxu0 %v179
    %211 = vmatprep.subr.mxu0 0.0
    %212 = vmatpush1.msra.mxu0 %v143
    %213 = vmatprep.subr.mxu0 0.0
    %214 = vmatpush2.msra.mxu0 0.0
    %215 = vmatprep.subr.mxu0 0.0
    %216 = vmatpush2.msra.mxu0 0.0
    %217 = vmatprep.subr.mxu0 0.0
    %218 = vmatpush2.msra.mxu0 0.0
    %219 = vmatprep.subr.mxu0 0.0
    %220 = vmatpush2.msra.mxu0 0.0
    %221 = vmatprep.subr.mxu0 0.0
    %222 = vmatpush2.msra.mxu0 0.0
    %223 = vmatprep.subr.mxu0 0.0
    %224 = vmatpush2.msra.mxu0 0.0
    %225 = vmatprep.subr.mxu0 0.0
    %226 = vmatpush2.msra.mxu0 0.0
    %227 = vmatprep.subr.mxu0 0.0
    %228 = vmatpush2.msra.mxu0 0.0
    %229 = vmatprep.subr.mxu0 0.0
    %230 = vmatpush2.msra.mxu0 0.0
    %231 = vmatprep.subr.mxu0 0.0
    %232 = vmatpush2.msra.mxu0 0.0
    %233 = vmatprep.subr.mxu0 0.0
    %234 = vmatpush2.msra.mxu0 0.0
    %235 = vmatprep.subr.mxu0 0.0
    %236 = vmatpush2.msra.mxu0 0.0
    %237 = vmatprep.subr.mxu0 0.0
    %238 = vmatpush2.msra.mxu0 0.0
    %239 = vmatprep.subr.mxu0 0.0
    %240 = vmatpush2.msra.mxu0 0.0
    %241 = vmatprep.subr.mxu0 0.0
    %242 = vmatpush2.msra.mxu0 0.0
    %243 = vmatprep.subr.mxu0 0.0
    %244 = vmatpush2.msra.mxu0 0.0
    %245 = vmatprep.mubr.f32.mxu0 0.0
    %246 = vmatmul.mubr.f32.gmra.mxu0 %v154
    %v247 = vpop.f32.mrf.mxu0
    %v248 = vadd.f32 %v150, %v247
    %v249 = vpop.f32.mrf.mxu0
    %250 = vmatprep.mubr.f32.mxu0 0.0
    %251 = vmatmul.mubr.f32.gmra.mxu0 %v157
    %v252 = vpop.f32.mrf.mxu0
    %v253 = vadd.f32 %v150, %v252
    %v254 = vpop.f32.mrf.mxu0
    %255 = vmatprep.mubr.f32.mxu0 0.0
    %256 = vmatmul.mubr.f32.gmra.mxu0 %v160
    %v257 = vpop.f32.mrf.mxu0
    %v258 = vadd.f32 %v150, %v257
    %v259 = vpop.f32.mrf.mxu0
    %260 = vmatprep.mubr.f32.mxu0 0.0
    %261 = vmatmul.mubr.f32.gmra.mxu0 %v163
    %v262 = vpop.f32.mrf.mxu0
    %v263 = vadd.f32 %v150, %v262
    %v264 = vpop.f32.mrf.mxu0
    %265 = vmatprep.mubr.f32.mxu0 0.0
    %266 = vmatmul.mubr.f32.gmra.mxu0 %v166
    %v267 = vpop.f32.mrf.mxu0
    %v268 = vadd.f32 %v150, %v267
    %v269 = vpop.f32.mrf.mxu0
    %270 = vmatprep.mubr.f32.mxu0 0.0
    %271 = vmatmul.mubr.f32.gmra.mxu0 %v169
    %v272 = vpop.f32.mrf.mxu0
    %v273 = vadd.f32 %v150, %v272
    %v274 = vpop.f32.mrf.mxu0
    %275 = vmatprep.mubr.f32.mxu0 0.0
    %276 = vmatmul.mubr.f32.gmra.mxu0 %v172
    %v277 = vpop.f32.mrf.mxu0
    %v278 = vadd.f32 %v150, %v277
    %v279 = vpop.f32.mrf.mxu0
    %280 = vmatprep.mubr.f32.mxu0 0.0
    %281 = vmatmul.mubr.f32.gmra.mxu0 %v175
    %v282 = vpop.f32.mrf.mxu0
    %v283 = vadd.f32 %v150, %v282
    %v284 = vpop.f32.mrf.mxu0
    %285 = vdwg.mxu0
    %v286 = vmax.f32 %v248, 0.0
    %v287 = vmax.f32 %v253, 0.0
    %v288 = vmax.f32 %v258, 0.0
    %v289 = vmax.f32 %v263, 0.0
    %v290 = vmax.f32 %v268, 0.0
    %v291 = vmax.f32 %v273, 0.0
    %v292 = vmax.f32 %v278, 0.0
    %v293 = vmax.f32 %v283, 0.0
    %vm294 = vcmask 261120
    %295 = vst.msk [vmem:[#allocation3] sm:$0xff] %vm294, %v286
    %296 = vst.msk [vmem:[#allocation3 + $0x8] sm:$0xff] %vm294, %v287
    %297 = vst.msk [vmem:[#allocation3 + $0x10] sm:$0xff] %vm294, %v288
    %vm298 = vcmask 257024
    %299 = vst.msk [vmem:[#allocation3 + $0x18] sm:$0xf] %vm298, %v289
    %304 = vrot.lane.b32.xlu0 %v286, 32
    %v305 = vpop.permute.xlu0 %304
    %306 = vrot.lane.b32.xlu0 %v287, 32
    %v307 = vpop.permute.xlu0 %306
    %308 = vrot.lane.b32.xlu0 %v288, 32
    %v309 = vpop.permute.xlu0 %308
    %310 = vrot.lane.b32.xlu0 %v289, 32
    %v311 = vpop.permute.xlu0 %310
    %vm316 = vcmask 523521
    %317 = vst.msk [vmem:[#allocation3 - $0x1] sm:$0xfe] %vm316, %v305
    %vm318 = vcmask 523520
    %319 = vst.msk [vmem:[#allocation3 + $0x7] sm:$0xff] %vm318, %v307
    %320 = vst.msk [vmem:[#allocation3 + $0xf] sm:$0xff] %vm318, %v309
    %vm321 = vcmask 520448
    %322 = vst.msk [vmem:[#allocation3 + $0x17] sm:$0x1f] %vm321, %v311
    %323 = vrot.lane.b32.xlu0 %v286, 64
    %v324 = vpop.permute.xlu0 %323
    %325 = vrot.lane.b32.xlu0 %v287, 64
    %v326 = vpop.permute.xlu0 %325
    %327 = vrot.lane.b32.xlu0 %v288, 64
    %v328 = vpop.permute.xlu0 %327
    %329 = vrot.lane.b32.xlu0 %v289, 64
    %v330 = vpop.permute.xlu0 %329
    %vm335 = vcmask 785922
    %336 = vst.msk [vmem:[#allocation3 - $0x2] sm:$0xfc] %vm335, %v324
    %vm337 = vcmask 785920
    %338 = vst.msk [vmem:[#allocation3 + $0x6] sm:$0xff] %vm337, %v326
    %339 = vst.msk [vmem:[#allocation3 + $0xe] sm:$0xff] %vm337, %v328
    %vm340 = vcmask 783872
    %341 = vst.msk [vmem:[#allocation3 + $0x16] sm:$0x3f] %vm340, %v330
    %vm342 = vcmask 261126
    %343 = vst.msk [vmem:[#allocation3 + $0x16] sm:$0xc0] %vm342, %v289
    %344 = vst.msk [vmem:[#allocation3 + $0x1e] sm:$0xff] %vm294, %v290
    %345 = vst.msk [vmem:[#allocation3 + $0x26] sm:$0xff] %vm294, %v291
    %346 = vst.msk [vmem:[#allocation3 + $0x2e] sm:$0xff] %vm294, %v292
    %vm347 = vcmask 254976
    %348 = vst.msk [vmem:[#allocation3 + $0x36] sm:$0x3] %vm347, %v293
    %353 = vrot.lane.b32.xlu0 %v290, 32
    %v354 = vpop.permute.xlu0 %353
    %355 = vrot.lane.b32.xlu0 %v291, 32
    %v356 = vpop.permute.xlu0 %355
    %357 = vrot.lane.b32.xlu0 %v292, 32
    %v358 = vpop.permute.xlu0 %357
    %359 = vrot.lane.b32.xlu0 %v293, 32
    %v360 = vpop.permute.xlu0 %359
    %vm365 = vcmask 523527
    %366 = vst.msk [vmem:[#allocation3 + $0x15] sm:$0x80] %vm365, %v311
    %367 = vst.msk [vmem:[#allocation3 + $0x1d] sm:$0xff] %vm318, %v354
    %368 = vst.msk [vmem:[#allocation3 + $0x25] sm:$0xff] %vm318, %v356
    %369 = vst.msk [vmem:[#allocation3 + $0x2d] sm:$0xff] %vm318, %v358
    %vm370 = vcmask 518400
    %371 = vst.msk [vmem:[#allocation3 + $0x35] sm:$0x7] %vm370, %v360
    %372 = vrot.lane.b32.xlu0 %v290, 64
    %v373 = vpop.permute.xlu0 %372
    %374 = vrot.lane.b32.xlu0 %v291, 64
    %v375 = vpop.permute.xlu0 %374
    %376 = vrot.lane.b32.xlu0 %v292, 64
    %v377 = vpop.permute.xlu0 %376
    %378 = vrot.lane.b32.xlu0 %v293, 64
    %v379 = vpop.permute.xlu0 %378
    %384 = vst.msk [vmem:[#allocation3 + $0x1c] sm:$0xff] %vm337, %v373
    %385 = vst.msk [vmem:[#allocation3 + $0x24] sm:$0xff] %vm337, %v375
    %386 = vst.msk [vmem:[#allocation3 + $0x2c] sm:$0xff] %vm337, %v377
    %vm387 = vcmask 781824
    %388 = vst.msk [vmem:[#allocation3 + $0x34] sm:$0xf] %vm387, %v379
    %v389 = vld [vmem:[#allocation3] sm:$0xff]
    %v390 = vld [vmem:[#allocation3 + $0x8] sm:$0xff]
    %v391 = vld [vmem:[#allocation3 + $0x10] sm:$0xff]
    %v392 = vld [vmem:[#allocation3 + $0x18] sm:$0xff]
    %v393 = vld [vmem:[#allocation3 + $0x20] sm:$0xff]
    %v394 = vld [vmem:[#allocation3 + $0x28] sm:$0xff]
    %v395 = vld [vmem:[#allocation3 + $0x30] sm:$0xff]
    %v396 = vld [vmem:[%s3] sm:$0xff]
    %v397 = vld [vmem:[%s3 + $0x8] sm:$0xff]
    %v398 = vld [vmem:[%s3 + $0x10] sm:$0xff]
    %v399 = vld [vmem:[%s3 + $0x18] sm:$0xff]
    %v400 = vld [vmem:[%s3 + $0x20] sm:$0xff]
    %v401 = vld [vmem:[%s3 + $0x28] sm:$0xff]
    %v402 = vld [vmem:[%s3 + $0x30] sm:$0xff]
    %v403 = vld [vmem:[%s3 + $0x38] sm:$0xff]
    %v404 = vld [vmem:[%s3 + $0x40] sm:$0xff]
    %v405 = vld [vmem:[%s3 + $0x48] sm:$0xff]
    %v406 = vld [vmem:[%s3 + $0x50] sm:$0xff]
    %v407 = vld [vmem:[%s3 + $0x58] sm:$0xff]
    %v408 = vld [vmem:[%s4] sm:$0x1]
    %v410 = vlaneseq
    %v411 = vshrl.u32 %v410, 7
    %v412 = vsub.s32 0, %v411
    %v413 = vrot.slane %v408, %v412
    %vm415 = vcmask 785408
    %v417 = vsel %vm415, %v389, 0
    %v420 = vsel %vm415, %v390, 0
    %v423 = vsel %vm415, %v391, 0
    %v426 = vsel %vm415, %v392, 0
    %v429 = vsel %vm415, %v393, 0
    %v432 = vsel %vm415, %v394, 0
    %v435 = vsel %vm415, %v395, 0
    %437 = vmatprep.subr.mxu0 0.0
    %438 = vmatpush1.msra.mxu0 0.0
    %439 = vmatprep.subr.mxu0 0.0
    %440 = vmatpush1.msra.mxu0 0.0
    %441 = vmatprep.subr.mxu0 0.0
    %442 = vmatpush1.msra.mxu0 0.0
    %443 = vmatprep.subr.mxu0 0.0
    %444 = vmatpush1.msra.mxu0 0.0
    %445 = vmatprep.subr.mxu0 0.0
    %446 = vmatpush1.msra.mxu0 %v407
    %447 = vmatprep.subr.mxu0 0.0
    %448 = vmatpush1.msra.mxu0 %v406
    %449 = vmatprep.subr.mxu0 0.0
    %450 = vmatpush1.msra.mxu0 %v405
    %451 = vmatprep.subr.mxu0 0.0
    %452 = vmatpush1.msra.mxu0 %v404
    %453 = vmatprep.subr.mxu0 0.0
    %454 = vmatpush1.msra.mxu0 %v403
    %455 = vmatprep.subr.mxu0 0.0
    %456 = vmatpush1.msra.mxu0 %v402
    %457 = vmatprep.subr.mxu0 0.0
    %458 = vmatpush1.msra.mxu0 %v401
    %459 = vmatprep.subr.mxu0 0.0
    %460 = vmatpush1.msra.mxu0 %v400
    %461 = vmatprep.subr.mxu0 0.0
    %462 = vmatpush1.msra.mxu0 %v399
    %463 = vmatprep.subr.mxu0 0.0
    %464 = vmatpush1.msra.mxu0 %v398
    %465 = vmatprep.subr.mxu0 0.0
    %466 = vmatpush1.msra.mxu0 %v397
    %467 = vmatprep.subr.mxu0 0.0
    %468 = vmatpush1.msra.mxu0 %v396
    %469 = vmatprep.subr.mxu0 0.0
    %470 = vmatpush2.msra.mxu0 0.0
    %471 = vmatprep.subr.mxu0 0.0
    %472 = vmatpush2.msra.mxu0 0.0
    %473 = vmatprep.subr.mxu0 0.0
    %474 = vmatpush2.msra.mxu0 0.0
    %475 = vmatprep.subr.mxu0 0.0
    %476 = vmatpush2.msra.mxu0 0.0
    %477 = vmatprep.subr.mxu0 0.0
    %478 = vmatpush2.msra.mxu0 0.0
    %479 = vmatprep.subr.mxu0 0.0
    %480 = vmatpush2.msra.mxu0 0.0
    %481 = vmatprep.subr.mxu0 0.0
    %482 = vmatpush2.msra.mxu0 0.0
    %483 = vmatprep.subr.mxu0 0.0
    %484 = vmatpush2.msra.mxu0 0.0
    %485 = vmatprep.subr.mxu0 0.0
    %486 = vmatpush2.msra.mxu0 0.0
    %487 = vmatprep.subr.mxu0 0.0
    %488 = vmatpush2.msra.mxu0 0.0
    %489 = vmatprep.subr.mxu0 0.0
    %490 = vmatpush2.msra.mxu0 0.0
    %491 = vmatprep.subr.mxu0 0.0
    %492 = vmatpush2.msra.mxu0 0.0
    %493 = vmatprep.subr.mxu0 0.0
    %494 = vmatpush2.msra.mxu0 0.0
    %495 = vmatprep.subr.mxu0 0.0
    %496 = vmatpush2.msra.mxu0 0.0
    %497 = vmatprep.subr.mxu0 0.0
    %498 = vmatpush2.msra.mxu0 0.0
    %499 = vmatprep.subr.mxu0 0.0
    %500 = vmatpush2.msra.mxu0 0.0
    %501 = vmatprep.mubr.f32.mxu0 0.0
    %502 = vmatmul.mubr.f32.gmra.mxu0 %v417
    %v503 = vpop.f32.mrf.mxu0
    %v504 = vadd.f32 %v413, %v503
    %v505 = vpop.f32.mrf.mxu0
    %506 = vmatprep.mubr.f32.mxu0 0.0
    %507 = vmatmul.mubr.f32.gmra.mxu0 %v420
    %v508 = vpop.f32.mrf.mxu0
    %v509 = vadd.f32 %v413, %v508
    %v510 = vpop.f32.mrf.mxu0
    %511 = vmatprep.mubr.f32.mxu0 0.0
    %512 = vmatmul.mubr.f32.gmra.mxu0 %v423
    %v513 = vpop.f32.mrf.mxu0
    %v514 = vadd.f32 %v413, %v513
    %v515 = vpop.f32.mrf.mxu0
    %516 = vmatprep.mubr.f32.mxu0 0.0
    %517 = vmatmul.mubr.f32.gmra.mxu0 %v426
    %v518 = vpop.f32.mrf.mxu0
    %v519 = vadd.f32 %v413, %v518
    %v520 = vpop.f32.mrf.mxu0
    %521 = vmatprep.mubr.f32.mxu0 0.0
    %522 = vmatmul.mubr.f32.gmra.mxu0 %v429
    %v523 = vpop.f32.mrf.mxu0
    %v524 = vadd.f32 %v413, %v523
    %v525 = vpop.f32.mrf.mxu0
    %526 = vmatprep.mubr.f32.mxu0 0.0
    %527 = vmatmul.mubr.f32.gmra.mxu0 %v432
    %v528 = vpop.f32.mrf.mxu0
    %v529 = vadd.f32 %v413, %v528
    %v530 = vpop.f32.mrf.mxu0
    %531 = vmatprep.mubr.f32.mxu0 0.0
    %532 = vmatmul.mubr.f32.gmra.mxu0 %v435
    %v533 = vpop.f32.mrf.mxu0
    %v534 = vadd.f32 %v413, %v533
    %v535 = vpop.f32.mrf.mxu0
    %536 = vdwg.mxu0
    %v537 = vmax.f32 %v504, 0.0
    %v538 = vmax.f32 %v509, 0.0
    %v539 = vmax.f32 %v514, 0.0
    %v540 = vmax.f32 %v519, 0.0
    %v541 = vmax.f32 %v524, 0.0
    %v542 = vmax.f32 %v529, 0.0
    %v543 = vmax.f32 %v534, 0.0
    %vm544 = vcmask 523264
    %545 = vst.msk [vmem:[#allocation4] sm:$0xff] %vm544, %v537
    %546 = vst.msk [vmem:[#allocation4 + $0x10] sm:$0xff] %vm544, %v538
    %547 = vst.msk [vmem:[#allocation4 + $0x20] sm:$0xff] %vm544, %v539
    %vm548 = vcmask 517120
    %549 = vst.msk [vmem:[#allocation4 + $0x30] sm:$0x3] %vm548, %v540
    %vm554 = vcmask 1046528
    %v555 = vrot.slane %v537, 1
    %v556 = vrot.slane %v538, 1
    %v557 = vsel %vm554, %v555, %v556
    %v558 = vrot.slane %v539, 1
    %v559 = vsel %vm554, %v556, %v558
    %v560 = vrot.slane %v540, 1
    %v561 = vsel %vm554, %v558, %v560
    %562 = vrot.lane.b32.xlu0 %v557, 64
    %v563 = vpop.permute.xlu0 %562
    %564 = vrot.lane.b32.xlu0 %v559, 64
    %v565 = vpop.permute.xlu0 %564
    %566 = vrot.lane.b32.xlu0 %v561, 64
    %v567 = vpop.permute.xlu0 %566
    %568 = vrot.lane.b32.xlu0 %v560, 64
    %v569 = vpop.permute.xlu0 %568
    %vm574 = vcmask 1048064
    %575 = vst.msk [vmem:[#allocation4] sm:$0xff] %vm574, %v563
    %576 = vst.msk [vmem:[#allocation4 + $0x10] sm:$0xff] %vm574, %v565
    %577 = vst.msk [vmem:[#allocation4 + $0x20] sm:$0xff] %vm574, %v567
    %vm578 = vcmask 1041920
    %579 = vst.msk [vmem:[#allocation4 + $0x30] sm:$0x3] %vm578, %v569
    %vm580 = vcmask 1045504
    %v581 = vrot.slane %v537, 2
    %v582 = vrot.slane %v538, 2
    %v583 = vsel %vm580, %v581, %v582
    %v584 = vrot.slane %v539, 2
    %v585 = vsel %vm580, %v582, %v584
    %v586 = vrot.slane %v540, 2
    %v587 = vsel %vm580, %v584, %v586
    %592 = vst.msk [vmem:[#allocation4 + $0x8] sm:$0xff] %vm544, %v583
    %593 = vst.msk [vmem:[#allocation4 + $0x18] sm:$0xff] %vm544, %v585
    %594 = vst.msk [vmem:[#allocation4 + $0x28] sm:$0xff] %vm544, %v587
    %595 = vst.msk [vmem:[#allocation4 + $0x38] sm:$0x3] %vm548, %v586
    %v599 = vrot.slane %v541, 2
    %v600 = vsel %vm580, %v586, %v599
    %v601 = vrot.slane %v542, 2
    %v602 = vsel %vm580, %v599, %v601
    %v603 = vrot.slane %v543, 2
    %v604 = vsel %vm580, %v601, %v603
    %vm609 = vcmask 523266
    %610 = vst.msk [vmem:[#allocation4 + $0x30] sm:$0xfc] %vm609, %v600
    %611 = vst.msk [vmem:[#allocation4 + $0x40] sm:$0xff] %vm544, %v602
    %612 = vst.msk [vmem:[#allocation4 + $0x50] sm:$0xff] %vm544, %v604
    %vm613 = vcmask 519168
    %614 = vst.msk [vmem:[#allocation4 + $0x60] sm:$0xf] %vm613, %v603
    %vm615 = vcmask 1044480
    %v616 = vrot.slane %v540, 3
    %v617 = vrot.slane %v541, 3
    %v618 = vsel %vm615, %v616, %v617
    %v619 = vrot.slane %v542, 3
    %v620 = vsel %vm615, %v617, %v619
    %v621 = vrot.slane %v543, 3
    %v622 = vsel %vm615, %v619, %v621
    %623 = vrot.lane.b32.xlu0 %v618, 64
    %v624 = vpop.permute.xlu0 %623
    %625 = vrot.lane.b32.xlu0 %v620, 64
    %v626 = vpop.permute.xlu0 %625
    %627 = vrot.lane.b32.xlu0 %v622, 64
    %v628 = vpop.permute.xlu0 %627
    %629 = vrot.lane.b32.xlu0 %v621, 64
    %v630 = vpop.permute.xlu0 %629
    %vm635 = vcmask 1048066
    %636 = vst.msk [vmem:[#allocation4 + $0x30] sm:$0xfc] %vm635, %v624
    %637 = vst.msk [vmem:[#allocation4 + $0x40] sm:$0xff] %vm574, %v626
    %638 = vst.msk [vmem:[#allocation4 + $0x50] sm:$0xff] %vm574, %v628
    %vm639 = vcmask 1043968
    %640 = vst.msk [vmem:[#allocation4 + $0x60] sm:$0xf] %vm639, %v630
    %v641 = vrot.slane %v540, 4
    %v642 = vrot.slane %v541, 4
    %v643 = vsel %vm177, %v641, %v642
    %v644 = vrot.slane %v542, 4
    %v645 = vsel %vm177, %v642, %v644
    %v646 = vrot.slane %v543, 4
    %v647 = vsel %vm177, %v644, %v646
    %652 = vst.msk [vmem:[#allocation4 + $0x38] sm:$0xfc] %vm609, %v643
    %653 = vst.msk [vmem:[#allocation4 + $0x48] sm:$0xff] %vm544, %v645
    %654 = vst.msk [vmem:[#allocation4 + $0x58] sm:$0xff] %vm544, %v647
    %655 = vst.msk [vmem:[#allocation4 + $0x68] sm:$0xf] %vm613, %v646
    %v656 = vld [vmem:[#allocation4] sm:$0xff]
    %v657 = vld [vmem:[#allocation4 + $0x8] sm:$0xff]
    %v658 = vld [vmem:[#allocation4 + $0x10] sm:$0xff]
    %v659 = vld [vmem:[#allocation4 + $0x18] sm:$0xff]
    %v660 = vld [vmem:[#allocation4 + $0x20] sm:$0xff]
    %v661 = vld [vmem:[#allocation4 + $0x28] sm:$0xff]
    %v662 = vld [vmem:[#allocation4 + $0x30] sm:$0xff]
    %v663 = vld [vmem:[#allocation4 + $0x38] sm:$0xff]
    %v664 = vld [vmem:[#allocation4 + $0x40] sm:$0xff]
    %v665 = vld [vmem:[#allocation4 + $0x48] sm:$0xff]
    %v666 = vld [vmem:[#allocation4 + $0x50] sm:$0xff]
    %v667 = vld [vmem:[#allocation4 + $0x58] sm:$0xff]
    %v668 = vld [vmem:[#allocation4 + $0x60] sm:$0xf]
    %v669 = vld [vmem:[#allocation4 + $0x68] sm:$0xf]
    %v670 = vld [vmem:[#allocation5] sm:$0xff]
    %v671 = vld [vmem:[#allocation5 + $0x8] sm:$0xff]
    %v672 = vld [vmem:[#allocation5 + $0x10] sm:$0xff]
    %v673 = vld [vmem:[#allocation5 + $0x18] sm:$0xff]
    %v674 = vld [vmem:[#allocation5 + $0x20] sm:$0xff]
    %v675 = vld [vmem:[#allocation5 + $0x28] sm:$0xff]
    %v676 = vld [vmem:[#allocation5 + $0x30] sm:$0xff]
    %v677 = vld [vmem:[#allocation5 + $0x38] sm:$0xff]
    %v678 = vld [vmem:[#allocation5 + $0x40] sm:$0xff]
    %v679 = vld [vmem:[#allocation5 + $0x48] sm:$0xff]
    %v680 = vld [vmem:[#allocation5 + $0x50] sm:$0xff]
    %v681 = vld [vmem:[#allocation5 + $0x58] sm:$0xff]
    %v682 = vld [vmem:[#allocation5 + $0x60] sm:$0xff]
    %v683 = vld [vmem:[#allocation5 + $0x68] sm:$0xff]
    %v684 = vld [vmem:[#allocation5 + $0x70] sm:$0xff]
    %v685 = vld [vmem:[#allocation5 + $0x78] sm:$0xff]
    %v686 = vld [vmem:[#allocation5 + $0x80] sm:$0xff]
    %v687 = vld [vmem:[#allocation5 + $0x88] sm:$0xff]
    %v688 = vld [vmem:[#allocation5 + $0x90] sm:$0xff]
    %v689 = vld [vmem:[#allocation5 + $0x98] sm:$0xff]
    %v690 = vld [vmem:[#allocation5 + $0xa0] sm:$0xff]
    %v691 = vld [vmem:[#allocation5 + $0xa8] sm:$0xff]
    %v692 = vld [vmem:[#allocation5 + $0xb0] sm:$0xff]
    %v693 = vld [vmem:[#allocation5 + $0xb8] sm:$0xff]
    %v694 = vld [vmem:[%s6] sm:$0x1]
    %v696 = vlaneseq
    %v697 = vshrl.u32 %v696, 7
    %v698 = vsub.s32 0, %v697
    %v699 = vrot.slane %v694, %v698
    %v702 = vsel %vm544, %v657, 0
    %v705 = vsel %vm544, %v659, 0
    %v708 = vsel %vm544, %v661, 0
    %v711 = vsel %vm544, %v663, 0
    %v714 = vsel %vm544, %v665, 0
    %v717 = vsel %vm544, %v667, 0
    %v720 = vsel %vm544, %v669, 0
    %722 = vmatprep.subr.mxu0 0.0
    %723 = vmatpush1.msra.mxu0 %v685
    %724 = vmatprep.subr.mxu0 0.0
    %725 = vmatpush1.msra.mxu0 %v684
    %726 = vmatprep.subr.mxu0 0.0
    %727 = vmatpush1.msra.mxu0 %v683
    %728 = vmatprep.subr.mxu0 0.0
    %729 = vmatpush1.msra.mxu0 %v682
    %730 = vmatprep.subr.mxu0 0.0
    %731 = vmatpush1.msra.mxu0 %v681
    %732 = vmatprep.subr.mxu0 0.0
    %733 = vmatpush1.msra.mxu0 %v680
    %734 = vmatprep.subr.mxu0 0.0
    %735 = vmatpush1.msra.mxu0 %v679
    %736 = vmatprep.subr.mxu0 0.0
    %737 = vmatpush1.msra.mxu0 %v678
    %738 = vmatprep.subr.mxu0 0.0
    %739 = vmatpush1.msra.mxu0 %v677
    %740 = vmatprep.subr.mxu0 0.0
    %741 = vmatpush1.msra.mxu0 %v676
    %742 = vmatprep.subr.mxu0 0.0
    %743 = vmatpush1.msra.mxu0 %v675
    %744 = vmatprep.subr.mxu0 0.0
    %745 = vmatpush1.msra.mxu0 %v674
    %746 = vmatprep.subr.mxu0 0.0
    %747 = vmatpush1.msra.mxu0 %v673
    %748 = vmatprep.subr.mxu0 0.0
    %749 = vmatpush1.msra.mxu0 %v672
    %750 = vmatprep.subr.mxu0 0.0
    %751 = vmatpush1.msra.mxu0 %v671
    %752 = vmatprep.subr.mxu0 0.0
    %753 = vmatpush1.msra.mxu0 %v670
    %754 = vmatprep.subr.mxu0 0.0
    %755 = vmatpush2.msra.mxu0 0.0
    %756 = vmatprep.subr.mxu0 0.0
    %757 = vmatpush2.msra.mxu0 0.0
    %758 = vmatprep.subr.mxu0 0.0
    %759 = vmatpush2.msra.mxu0 0.0
    %760 = vmatprep.subr.mxu0 0.0
    %761 = vmatpush2.msra.mxu0 0.0
    %762 = vmatprep.subr.mxu0 0.0
    %763 = vmatpush2.msra.mxu0 0.0
    %764 = vmatprep.subr.mxu0 0.0
    %765 = vmatpush2.msra.mxu0 0.0
    %766 = vmatprep.subr.mxu0 0.0
    %767 = vmatpush2.msra.mxu0 0.0
    %768 = vmatprep.subr.mxu0 0.0
    %769 = vmatpush2.msra.mxu0 0.0
    %770 = vmatprep.subr.mxu0 0.0
    %771 = vmatpush2.msra.mxu0 %v693
    %772 = vmatprep.subr.mxu0 0.0
    %773 = vmatpush2.msra.mxu0 %v692
    %774 = vmatprep.subr.mxu0 0.0
    %775 = vmatpush2.msra.mxu0 %v691
    %776 = vmatprep.subr.mxu0 0.0
    %777 = vmatpush2.msra.mxu0 %v690
    %778 = vmatprep.subr.mxu0 0.0
    %779 = vmatpush2.msra.mxu0 %v689
    %780 = vmatprep.subr.mxu0 0.0
    %781 = vmatpush2.msra.mxu0 %v688
    %782 = vmatprep.subr.mxu0 0.0
    %783 = vmatpush2.msra.mxu0 %v687
    %784 = vmatprep.subr.mxu0 0.0
    %785 = vmatpush2.msra.mxu0 %v686
    %786 = vmatprep.mubr.f32.mxu0 %v702
    %787 = vmatmul.mubr.f32.gmra.mxu0 %v656
    %v788 = vpop.f32.mrf.mxu0
    %v789 = vadd.f32 %v699, %v788
    %v790 = vpop.f32.mrf.mxu0
    %791 = vmatprep.mubr.f32.mxu0 %v705
    %792 = vmatmul.mubr.f32.gmra.mxu0 %v658
    %v793 = vpop.f32.mrf.mxu0
    %v794 = vadd.f32 %v699, %v793
    %v795 = vpop.f32.mrf.mxu0
    %796 = vmatprep.mubr.f32.mxu0 %v708
    %797 = vmatmul.mubr.f32.gmra.mxu0 %v660
    %v798 = vpop.f32.mrf.mxu0
    %v799 = vadd.f32 %v699, %v798
    %v800 = vpop.f32.mrf.mxu0
    %801 = vmatprep.mubr.f32.mxu0 %v711
    %802 = vmatmul.mubr.f32.gmra.mxu0 %v662
    %v803 = vpop.f32.mrf.mxu0
    %v804 = vadd.f32 %v699, %v803
    %v805 = vpop.f32.mrf.mxu0
    %806 = vmatprep.mubr.f32.mxu0 %v714
    %807 = vmatmul.mubr.f32.gmra.mxu0 %v664
    %v808 = vpop.f32.mrf.mxu0
    %v809 = vadd.f32 %v699, %v808
    %v810 = vpop.f32.mrf.mxu0
    %811 = vmatprep.mubr.f32.mxu0 %v717
    %812 = vmatmul.mubr.f32.gmra.mxu0 %v666
    %v813 = vpop.f32.mrf.mxu0
    %v814 = vadd.f32 %v699, %v813
    %v815 = vpop.f32.mrf.mxu0
    %816 = vmatprep.mubr.f32.mxu0 %v720
    %817 = vmatmul.mubr.f32.gmra.mxu0 %v668
    %v818 = vpop.f32.mrf.mxu0
    %v819 = vadd.f32 %v699, %v818
    %v820 = vpop.f32.mrf.mxu0
    %821 = vdwg.mxu0
    %v822 = vmax.f32 %v789, 0.0
    %v823 = vmax.f32 %v794, 0.0
    %v824 = vmax.f32 %v799, 0.0
    %v825 = vmax.f32 %v804, 0.0
    %v826 = vmax.f32 %v809, 0.0
    %v827 = vmax.f32 %v814, 0.0
    %v828 = vmax.f32 %v819, 0.0
    %829 = vst [vmem:[%s7] sm:$0xff] %v822
    %830 = vst [vmem:[%s7 + $0x8] sm:$0xff] %v823
    %831 = vst [vmem:[%s7 + $0x10] sm:$0xff] %v824
    %832 = vst [vmem:[%s7 + $0x18] sm:$0x3] %v825
    %s833 = scalar_lea.vmem %s7, 32
    %834 = vst [vmem:[%s833 - $0x2] sm:$0xfc] %v825
    %835 = vst [vmem:[%s833 + $0x6] sm:$0xff] %v826
    %836 = vst [vmem:[%s833 + $0xe] sm:$0xff] %v827
    %837 = vst [vmem:[%s833 + $0x16] sm:$0xf] %v828
    // Predicated region
    $region34: #{cpchar_forward.1} parent=1 // pred_check
      _
    $region35: #{cpchar_forward.1} parent=1 // pred_check_branch
      %839 = sbr.rel (0) target = $region37
    $region36: #{cpchar_forward.1} parent=1 // pred_region
      _
    $region37: #{cpchar_forward.1} parent=1 // pred_fallthru
      _
    // Predicated region
    $region38: #{cpchar_forward.1} parent=1 // pred_check
      _
    $region39: #{cpchar_forward.1} parent=1 // pred_check_branch
      %841 = sbr.rel (0) target = $region41
    $region40: #{cpchar_forward.1} parent=1 // pred_region
      _
    $region41: #{cpchar_forward.1} parent=1 // pred_fallthru
      _
    %842 = vsyncpa [#allocation6], 1

</llo_original>
